<compile_context>
chip_gen: v7x
topology: tpu7x:2x2x1
jax: 0.10.0
libtpu: 0.0.40
codegen_flags: <defaults>
</compile_context>

<pallas_src>
import numpy as np
import jax
import jax.numpy as jnp
from jax import lax
from jax.experimental import pallas as pl
from jax.experimental.pallas import tpu as pltpu

_MAX_UNROLL = 8   # max statically-unrolled height-pass matmuls per block


# ----------------------------- weights -------------------------------------

def _gaussian_weights(sigma: float):
    radius = int(round(3.0 * sigma))
    k = 2 * radius + 1
    x = np.arange(k, dtype=np.float64) - radius
    w = np.exp(-0.5 * (x / sigma) ** 2)
    w = w / w.sum()
    return radius, w


def _band_matrix(n: int, radius: int, w: np.ndarray) -> np.ndarray:
    """Banded matrix M with M[i, j] = w[(j - i) + radius] for |j - i| <= radius.

    Zero 'same' padding of the blur is encoded implicitly by the band edges.
    (w is symmetric, so this matrix works for both the left and right pass.)
    """
    idx = np.arange(n)
    diff = idx[None, :] - idx[:, None]
    tap = np.clip(diff + radius, 0, 2 * radius)
    m = np.where(np.abs(diff) <= radius, w[tap], 0.0)
    return m.astype(np.float32)


# ----------------------------- tiling helpers -------------------------------

def _round_up(v: int, m: int) -> int:
    return -(-v // m) * m


def _pick_lane_pack(nc: int, W: int, lane: int = 128) -> int:
    """Largest divisor g of nc with g*W <= 128 (lane-dense packing factor)."""
    if W >= lane:
        return 1
    g = 1
    for cand in range(1, lane // W + 1):
        if nc % cand == 0:
            g = cand
    return g


def _vmem_limit_bytes(default: int = 32 * 1024 * 1024) -> int:
    """Scoped VMEM limit: capped at half the physical capacity (v7x: 64 MiB)."""
    try:
        cap = int(pltpu.get_tpu_info().vmem_capacity_bytes)
        if cap > 0:
            return min(default, max(8 * 1024 * 1024, cap // 2))
    except Exception:
        pass
    return default


def _pick_batch_tile(n_slabs: int, H: int, G: int, itemsize: int,
                     budget_bytes: int, max_bt: int) -> int:
    """Largest divisor bt of n_slabs such that the double-buffered in/out
    blocks + f32 scratch fit the VMEM budget (with lane/sublane padding) and
    the grid keeps >= ~8 steps (>= 4 per v7x TensorCore) when possible."""
    Hp = _round_up(H, 8)
    Gp = _round_up(G, 128)
    # 2 x in + 2 x out blocks (BlockSpec double-buffering) + 1 x f32 scratch.
    per_img = Hp * Gp * (4 * max(int(itemsize), 1) + 4)
    cap = max(1, min(max_bt, n_slabs, max(1, budget_bytes // per_img)))
    divisors = [d for d in range(1, cap + 1) if n_slabs % d == 0]
    target = min(8, n_slabs)

    def rank(bt):
        grid = n_slabs // bt
        return (grid >= target, grid % 2 == 0 or grid == 1, bt)

    return max(divisors, key=rank)


def _pack_lanes(x3, g):
    nc, H, W = x3.shape
    if g == 1:
        return x3
    return (x3.reshape(nc // g, g, H, W)
              .transpose(0, 2, 1, 3)
              .reshape(nc // g, H, g * W))


def _unpack_lanes(y, g, nc, H, W):
    if g == 1:
        return y
    return (y.reshape(nc // g, H, g, W)
             .transpose(0, 2, 1, 3)
             .reshape(nc, H, W))


# ----------------------------- kernel ---------------------------------------

def _make_blur_kernel(bt: int, compute_dtype, merge_rows: bool, use_scratch: bool):
    def _height_pass(a, t_img, o_ref, img):
        o_ref[img] = jnp.dot(a, t_img.astype(compute_dtype),
                             preferred_element_type=jnp.float32).astype(o_ref.dtype)

    if use_scratch:
        # Large bt: width pass = ONE (bt*H, G) matmul into a f32 VMEM scratch,
        # height pass = rolled fori_loop (dynamic first-axis ref indexing keeps
        # code size independent of bt).
        def kernel(a_ref, b_ref, x_ref, o_ref, t_ref):
            _, H, G = x_ref.shape
            a = a_ref[...].astype(compute_dtype)
            bm = b_ref[...].astype(compute_dtype)
            x2 = x_ref[...].reshape(bt * H, G).astype(compute_dtype)
            t_ref[...] = jnp.dot(
                x2, bm, preferred_element_type=jnp.float32).reshape(bt, H, G)

            def body(img, carry):
                _height_pass(a, t_ref[img], o_ref, img)
                return carry

            lax.fori_loop(0, bt, body, 0)
        return kernel

    def kernel(a_ref, b_ref, x_ref, o_ref):
        _, H, G = x_ref.shape
        a = a_ref[...].astype(compute_dtype)
        bm = b_ref[...].astype(compute_dtype)
        if merge_rows:
            # Width pass: single MXU matmul over every row of the block
            # (full-M MXU feed), then a short static unroll (bt <= 8) for the
            # height pass; one lane-dense store per image.
            x2 = x_ref[...].reshape(bt * H, G).astype(compute_dtype)
            t3 = jnp.dot(x2, bm,
                         preferred_element_type=jnp.float32).reshape(bt, H, G)
            for img in range(bt):
                _height_pass(a, t3[img], o_ref, img)
        else:
            # H % 8 != 0: merging (bt, H) rows would force a relayout copy;
            # fall back to per-image passes (bt capped at _MAX_UNROLL here).
            for img in range(bt):
                xi = x_ref[img].astype(compute_dtype)
                t = jnp.dot(xi, bm, preferred_element_type=jnp.float32)
                _height_pass(a, t, o_ref, img)
    return kernel


# ----------------------------- wrapper ---------------------------------------

def gaussian_blur(x, sigma: float = 3.0):
    """x: (N, C, H, W) float array. Returns blurred array of same shape/dtype."""
    N, C, H, W = x.shape
    nc = N * C
    radius, w = _gaussian_weights(sigma)

    # Lane-dense packing: g images side by side along lanes (G = g*W <= 128
    # when W < 128), with a block-diagonal width-pass matrix.
    g = _pick_lane_pack(nc, W)
    G = g * W
    n_slabs = nc // g

    A = jnp.asarray(_band_matrix(H, radius, w))                      # (H, H)
    Bm = _band_matrix(W, radius, w)                                  # (W, W)
    Bp = jnp.asarray(np.kron(np.eye(g, dtype=np.float32), Bm))       # (G, G)

    xs = _pack_lanes(x.reshape(nc, H, W), g)                         # (n_slabs, H, G)

    vmem_limit = _vmem_limit_bytes()
    weight_vmem = 2 * 4 * (_round_up(H, 8) * _round_up(H, 128)
                           + _round_up(G, 8) * _round_up(G, 128))
    budget = max(0, int(0.75 * vmem_limit) - weight_vmem)
    max_bt = 64 if H % 8 == 0 else _MAX_UNROLL
    bt = _pick_batch_tile(n_slabs, H, G, x.dtype.itemsize, budget, max_bt)

    use_scratch = bt > _MAX_UNROLL
    merge_rows = (H % 8 == 0) or (bt == 1)
    compute_dtype = jnp.bfloat16 if x.dtype == jnp.bfloat16 else jnp.float32

    cost = pl.CostEstimate(
        flops=int(2 * n_slabs * H * G * (G + H)),
        transcendentals=0,
        bytes_accessed=int(2 * nc * H * W * x.dtype.itemsize + (H * H + G * G) * 4))

    scratch_shapes = [pltpu.VMEM((bt, H, G), jnp.float32)] if use_scratch else []

    y = pl.pallas_call(
        _make_blur_kernel(bt, compute_dtype, merge_rows, use_scratch),
        out_shape=jax.ShapeDtypeStruct((n_slabs, H, G), x.dtype),
        grid=(n_slabs // bt,),
        in_specs=[
            # Constant-index weight blocks stay resident across the grid.
            # TODO(synk): pipeline_mode=pl.Buffered(1) would halve their VMEM.
            pl.BlockSpec((H, H), lambda i: (0, 0)),
            pl.BlockSpec((G, G), lambda i: (0, 0)),
            pl.BlockSpec((bt, H, G), lambda i: (i, 0, 0)),
        ],
        out_specs=pl.BlockSpec((bt, H, G), lambda i: (i, 0, 0)),
        scratch_shapes=scratch_shapes,
        compiler_params=pltpu.CompilerParams(
            dimension_semantics=("parallel",),
            vmem_limit_bytes=vmem_limit),
        cost_estimate=cost,
    )(A, Bp, xs)

    out = _unpack_lanes(y, g, nc, H, W)
    return out.reshape(N, C, H, W)


# ----------------------------- reference & test ------------------------------

def _reference_blur(x, sigma: float = 3.0):
    # pure-JAX reference: depthwise separable Gaussian, zero 'same' padding
    radius, w = _gaussian_weights(sigma)
    wj = jnp.asarray(w, dtype=jnp.float32)
    N, C, H, W = x.shape
    K = 2 * radius + 1
    xp = jnp.pad(x.astype(jnp.float32),
                 ((0, 0), (0, 0), (radius, radius), (radius, radius)))
    tmp = sum(wj[k] * xp[:, :, :, k:k + W] for k in range(K))
    out = sum(wj[k] * tmp[:, :, k:k + H, :] for k in range(K))
    return out.astype(x.dtype)


if __name__ == "__main__":
    key = jax.random.PRNGKey(0)
    x = jax.random.normal(key, (2, 4, 16, 16), dtype=jnp.float32)

    y = jax.block_until_ready(gaussian_blur(x, sigma=3.0))
    y_ref = _reference_blur(x, sigma=3.0)

    assert y.shape == x.shape and y.dtype == x.dtype
    np.testing.assert_allclose(np.asarray(y), np.asarray(y_ref),
                               rtol=1e-5, atol=1e-5)
    print("KERNEL_OK")
</pallas_src>

<mosaic_0001>
module attributes {stable_mosaic.version = 11 : i64} {
  func.func @kernel(%arg0: i32, %arg1: memref<16x16xf32, #tpu.memory_space<vmem>>, %arg2: memref<128x128xf32, #tpu.memory_space<vmem>>, %arg3: memref<1x16x128xf32, #tpu.memory_space<vmem>>, %arg4: memref<1x16x128xf32, #tpu.memory_space<vmem>>) attributes {dimension_semantics = [#tpu.dimension_semantics<parallel>], iteration_bounds = array<i64: 1>, scalar_prefetch = 0 : i64, scratch_operands = 0 : i64, tpu.core_type = #tpu.core_type<tc>, window_params = [{pipeline_mode = #tpu.pipeline_mode<synchronous>, transform_indices = @transform_0, window_bounds = array<i64: 16, 16>}, {pipeline_mode = #tpu.pipeline_mode<synchronous>, transform_indices = @transform_1, window_bounds = array<i64: 128, 128>}, {transform_indices = @transform_2, window_bounds = array<i64: 1, 16, 128>}, {transform_indices = @transform_3, window_bounds = array<i64: 1, 16, 128>}]} {
    %c0 = arith.constant 0 : index
    %c0_0 = arith.constant 0 : index
    %0 = vector.load %arg1[%c0, %c0_0] : memref<16x16xf32, #tpu.memory_space<vmem>>, vector<16x16xf32>
    %c0_1 = arith.constant 0 : index
    %c0_2 = arith.constant 0 : index
    %1 = vector.load %arg2[%c0_1, %c0_2] : memref<128x128xf32, #tpu.memory_space<vmem>>, vector<128x128xf32>
    %c0_3 = arith.constant 0 : index
    %c0_4 = arith.constant 0 : index
    %c0_5 = arith.constant 0 : index
    %2 = vector.load %arg3[%c0_3, %c0_4, %c0_5] : memref<1x16x128xf32, #tpu.memory_space<vmem>>, vector<1x16x128xf32>
    %3 = vector.shape_cast %2 : vector<1x16x128xf32> to vector<16x128xf32>
    %cst = arith.constant dense<0.000000e+00> : vector<16x128xf32>
    %4 = tpu.matmul %3, %1, %cst {dimension_numbers = #tpu.dot_dimension_numbers<[1], [0], [0], [1], [0, 0, 1, 1], [], []>} : vector<16x128xf32>, vector<128x128xf32>, vector<16x128xf32> -> vector<16x128xf32>
    %5 = vector.shape_cast %4 : vector<16x128xf32> to vector<1x16x128xf32>
    %6 = vector.shape_cast %5 : vector<1x16x128xf32> to vector<16x128xf32>
    %cst_6 = arith.constant dense<0.000000e+00> : vector<16x128xf32>
    %7 = tpu.matmul %0, %6, %cst_6 {dimension_numbers = #tpu.dot_dimension_numbers<[1], [0], [0], [1], [0, 0, 1, 1], [], []>} : vector<16x16xf32>, vector<16x128xf32>, vector<16x128xf32> -> vector<16x128xf32>
    %c0_7 = arith.constant 0 : index
    %c0_8 = arith.constant 0 : index
    %c0_9 = arith.constant 0 : index
    %8 = vector.load %arg4[%c0_7, %c0_8, %c0_9] : memref<1x16x128xf32, #tpu.memory_space<vmem>>, vector<1x16x128xf32>
    %9 = vector.shape_cast %8 : vector<1x16x128xf32> to vector<16x128xf32>
    %10 = vector.shape_cast %7 : vector<16x128xf32> to vector<1x16x128xf32>
    tpu.vector_store %arg4[%c0_7, %c0_8, %c0_9], %10 {strides = array<i32>} : memref<1x16x128xf32, #tpu.memory_space<vmem>>, vector<1x16x128xf32>,
    return
  }
  func.func @transform_0(%arg0: i32) -> (i32, i32) {
    %c0_i32 = arith.constant 0 : i32
    %c0_i32_0 = arith.constant 0 : i32
    %c0_i32_1 = arith.constant 0 : i32
    return %c0_i32, %c0_i32_0 : i32, i32
  }
  func.func @transform_1(%arg0: i32) -> (i32, i32) {
    %c0_i32 = arith.constant 0 : i32
    %c0_i32_0 = arith.constant 0 : i32
    %c0_i32_1 = arith.constant 0 : i32
    return %c0_i32, %c0_i32_0 : i32, i32
  }
  func.func @transform_2(%arg0: i32) -> (i32, i32, i32) {
    %c0_i32 = arith.constant 0 : i32
    %c0_i32_0 = arith.constant 0 : i32
    %c0_i32_1 = arith.constant 0 : i32
    return %arg0, %c0_i32, %c0_i32_0 : i32, i32, i32
  }
  func.func @transform_3(%arg0: i32) -> (i32, i32, i32) {
    %c0_i32 = arith.constant 0 : i32
    %c0_i32_0 = arith.constant 0 : i32
    %c0_i32_1 = arith.constant 0 : i32
    return %arg0, %c0_i32, %c0_i32_0 : i32, i32, i32
  }
}

</mosaic_0001>

<llo_original>
// kernel: tpu_custom_call.1
$region0: #{tpu_custom_call.1}
  #allocation0 [shape = 'u32[]', space=smem, size = 0x4, offset = 0x4, fixed_abs, tag = 'smem constant byte address 0x4 - core index']
  #allocation1 [shape = 'u32[144,128]{1,0:T(1,128)}', space=vmem, size = 0x12000, scoped, tag = 'internal scratch']
  %s0 = inlined_call_operand.hbm [shape: f32[16,16], index: 0, kind: input, shape index: {}]
  %s1 = inlined_call_operand.hbm [shape: f32[128,128], index: 1, kind: input, shape index: {}]
  %s2 = inlined_call_operand.hbm [shape: f32[1,16,128], index: 2, kind: input, shape index: {}]
  %s3 = inlined_call_operand.hbm [shape: f32[1,16,128], index: 3, kind: output, shape index: {}]
  %s4 = sld [smem:[#allocation0]]
  $region34: #{tpu_custom_call.1} parent=0
    _
  %s6 = ssub.s32 1, %s4
  %s7 = scalar_select 0, %s6, %s4
  $region1: #{tpu_custom_call.1} parent=0
    #allocation2 [shape = 'u8[8192]{0}', space=vmem, size = 0x2000, scoped, tag = 'input window, operand 0, single buffered']
    #allocation3 [shape = 's32[1]{0}', space=sflag, size = 0x4, scoped, tag = 'scoped memory for tpu_custom_call.1']
    #allocation4 [shape = 's32[1]{0}', space=sflag, size = 0x4, scoped, tag = 'scoped memory for tpu_custom_call.1']
    #allocation5 [shape = 'u8[65536]{0}', space=vmem, size = 0x10000, scoped, tag = 'input window, operand 1, single buffered']
    #allocation6 [shape = 's32[1]{0}', space=sflag, size = 0x4, scoped, tag = 'scoped memory for tpu_custom_call.1']
    #allocation7 [shape = 'u8[8192]{0}', space=vmem, size = 0x2000, scoped, tag = 'input window, operand 2, single buffered']
    #allocation8 [shape = 'u8[8192]{0}', space=vmem, size = 0x2000, scoped, tag = 'output window, operand 0, single buffered']
    %8 = vsyncpa [#allocation3], 0
    %9 = vsyncpa [#allocation6], 0
    %10 = vsyncpa [#allocation4], 0
    // Predicated region
    $region2: #{tpu_custom_call.1} parent=1 // pred_check
      _
    $region3: #{tpu_custom_call.1} parent=1 // pred_check_branch
      %12 = sbr.rel (0) target = $region5
    $region4: #{tpu_custom_call.1} parent=1 // pred_region
      %s14 = ssub.s32 256, 256
      %15 = vsyncadd [#allocation3], %s14
      %s16 = sshll.u32 [#allocation2], 4
      %s17 = int_to_ptr.vmem [resolvable:$true] %s16
      %22 = dma.hbm_to_vmem [thread:$0]  %s0, 256, %s17, [#allocation3], 128, 128, 8
    $region5: #{tpu_custom_call.1} parent=1 // pred_fallthru
      _
    // Predicated region
    $region6: #{tpu_custom_call.1} parent=1 // pred_check
      _
    $region7: #{tpu_custom_call.1} parent=1 // pred_check_branch
      %24 = sbr.rel (0) target = $region9
    $region8: #{tpu_custom_call.1} parent=1 // pred_region
      %s26 = ssub.s32 2048, 2048
      %27 = vsyncadd [#allocation6], %s26
      %s28 = sshll.u32 [#allocation5], 4
      %s29 = int_to_ptr.vmem [resolvable:$true] %s28
      %34 = dma.hbm_to_vmem [thread:$0]  %s1, 2048, %s29, [#allocation6], 128, 128, 8
    $region9: #{tpu_custom_call.1} parent=1 // pred_fallthru
      _
    // Predicated region
    $region10: #{tpu_custom_call.1} parent=1 // pred_check
      _
    $region11: #{tpu_custom_call.1} parent=1 // pred_check_branch
      %36 = sbr.rel (0) target = $region13
    $region12: #{tpu_custom_call.1} parent=1 // pred_region
      %s38 = ssub.s32 256, 256
      %39 = vsyncadd [#allocation6], %s38
      %s40 = sshll.u32 [#allocation7], 4
      %s41 = int_to_ptr.vmem [resolvable:$true] %s40
      %46 = dma.hbm_to_vmem [thread:$0]  %s2, 256, %s41, [#allocation6], 128, 128, 8
    $region13: #{tpu_custom_call.1} parent=1 // pred_fallthru
      _
    // Predicated region
    $region14: #{tpu_custom_call.1} parent=1 // pred_check
      _
    $region15: #{tpu_custom_call.1} parent=1 // pred_check_branch
      %48 = sbr.rel (0) target = $region17
    $region16: #{tpu_custom_call.1} parent=1 // pred_region
      %49 = dma.done [#allocation3], 256
    $region17: #{tpu_custom_call.1} parent=1 // pred_fallthru
      _
    // Predicated region
    $region18: #{tpu_custom_call.1} parent=1 // pred_check
      _
    $region19: #{tpu_custom_call.1} parent=1 // pred_check_branch
      %51 = sbr.rel (0) target = $region21
    $region20: #{tpu_custom_call.1} parent=1 // pred_region
      %52 = dma.done [#allocation6], 2048
    $region21: #{tpu_custom_call.1} parent=1 // pred_fallthru
      _
    // Predicated region
    $region22: #{tpu_custom_call.1} parent=1 // pred_check
      _
    $region23: #{tpu_custom_call.1} parent=1 // pred_check_branch
      %54 = sbr.rel (0) target = $region25
    $region24: #{tpu_custom_call.1} parent=1 // pred_region
      %55 = dma.done [#allocation6], 256
    $region25: #{tpu_custom_call.1} parent=1 // pred_fallthru
      _
    %v56 = vld [vmem:[#allocation2] sm:$0xff]
    %v57 = vld [vmem:[#allocation2 + $0x8] sm:$0xff]
    %v58 = vld [vmem:[#allocation5] sm:$0xff]
    %v59 = vld [vmem:[#allocation5 + $0x8] sm:$0xff]
    %v60 = vld [vmem:[#allocation5 + $0x10] sm:$0xff]
    %v61 = vld [vmem:[#allocation5 + $0x18] sm:$0xff]
    %v62 = vld [vmem:[#allocation5 + $0x20] sm:$0xff]
    %v63 = vld [vmem:[#allocation5 + $0x28] sm:$0xff]
    %v64 = vld [vmem:[#allocation5 + $0x30] sm:$0xff]
    %v65 = vld [vmem:[#allocation5 + $0x38] sm:$0xff]
    %v66 = vld [vmem:[#allocation5 + $0x40] sm:$0xff]
    %v67 = vld [vmem:[#allocation5 + $0x48] sm:$0xff]
    %v68 = vld [vmem:[#allocation5 + $0x50] sm:$0xff]
    %v69 = vld [vmem:[#allocation5 + $0x58] sm:$0xff]
    %v70 = vld [vmem:[#allocation5 + $0x60] sm:$0xff]
    %v71 = vld [vmem:[#allocation5 + $0x68] sm:$0xff]
    %v72 = vld [vmem:[#allocation5 + $0x70] sm:$0xff]
    %v73 = vld [vmem:[#allocation5 + $0x78] sm:$0xff]
    %v74 = vld [vmem:[#allocation7] sm:$0xff]
    %v75 = vld [vmem:[#allocation7 + $0x8] sm:$0xff]
    %76 = vmatprep.subr.mxu0 0.0
    %77 = vmatpush1.msra.mxu0 %v58
    %78 = vmatprep.subr.mxu0 0.0
    %79 = vmatpush1.msra.mxu0 %v59
    %80 = vmatprep.subr.mxu0 0.0
    %81 = vmatpush1.msra.mxu0 %v60
    %82 = vmatprep.subr.mxu0 0.0
    %83 = vmatpush1.msra.mxu0 %v61
    %84 = vmatprep.subr.mxu0 0.0
    %85 = vmatpush1.msra.mxu0 %v62
    %86 = vmatprep.subr.mxu0 0.0
    %87 = vmatpush1.msra.mxu0 %v63
    %88 = vmatprep.subr.mxu0 0.0
    %89 = vmatpush1.msra.mxu0 %v64
    %90 = vmatprep.subr.mxu0 0.0
    %91 = vmatpush1.msra.mxu0 %v65
    %92 = vmatprep.subr.mxu0 0.0
    %93 = vmatpush1.msra.mxu0 %v66
    %94 = vmatprep.subr.mxu0 0.0
    %95 = vmatpush1.msra.mxu0 %v67
    %96 = vmatprep.subr.mxu0 0.0
    %97 = vmatpush1.msra.mxu0 %v68
    %98 = vmatprep.subr.mxu0 0.0
    %99 = vmatpush1.msra.mxu0 %v69
    %100 = vmatprep.subr.mxu0 0.0
    %101 = vmatpush1.msra.mxu0 %v70
    %102 = vmatprep.subr.mxu0 0.0
    %103 = vmatpush1.msra.mxu0 %v71
    %104 = vmatprep.subr.mxu0 0.0
    %105 = vmatpush1.msra.mxu0 %v72
    %106 = vmatprep.subr.mxu0 0.0
    %107 = vmatpush1.msra.mxu0 %v73
    %108 = vmatprep.subr.mxu0 0.0
    %109 = vmatpush1.msra.mxu0 0.0
    %110 = vmatprep.subr.mxu0 0.0
    %111 = vmatpush1.msra.mxu0 0.0
    %112 = vmatprep.subr.mxu0 0.0
    %113 = vmatpush1.msra.mxu0 0.0
    %114 = vmatprep.subr.mxu0 0.0
    %115 = vmatpush1.msra.mxu0 0.0
    %116 = vmatprep.subr.mxu0 0.0
    %117 = vmatpush1.msra.mxu0 0.0
    %118 = vmatprep.subr.mxu0 0.0
    %119 = vmatpush1.msra.mxu0 0.0
    %120 = vmatprep.subr.mxu0 0.0
    %121 = vmatpush1.msra.mxu0 0.0
    %122 = vmatprep.subr.mxu0 0.0
    %123 = vmatpush1.msra.mxu0 0.0
    %124 = vmatprep.subr.mxu0 0.0
    %125 = vmatpush1.msra.mxu0 0.0
    %126 = vmatprep.subr.mxu0 0.0
    %127 = vmatpush1.msra.mxu0 0.0
    %128 = vmatprep.subr.mxu0 0.0
    %129 = vmatpush1.msra.mxu0 0.0
    %130 = vmatprep.subr.mxu0 0.0
    %131 = vmatpush1.msra.mxu0 0.0
    %132 = vmatprep.subr.mxu0 0.0
    %133 = vmatpush1.msra.mxu0 0.0
    %134 = vmatprep.subr.mxu0 0.0
    %135 = vmatpush1.msra.mxu0 0.0
    %136 = vmatprep.subr.mxu0 0.0
    %137 = vmatpush1.msra.mxu0 0.0
    %138 = vmatprep.subr.mxu0 0.0
    %139 = vmatpush1.msra.mxu0 0.0
    %140 = vmatprep.mubr.f32.mxu0 0.0
    %141 = vmatmul.mubr.f32.gmra.mrb[0].mxu0 %v74
    %v142 = vpop.f32.mrb[0].mxu0
    %v143 = vadd.f32 0.0, %v142
    %v144 = vpop.f32.mrb[0].mxu0
    %145 = vmatprep.mubr.f32.mxu0 0.0
    %146 = vmatmul.mubr.f32.gmra.mrb[0].mxu0 %v75
    %v147 = vpop.f32.mrb[0].mxu0
    %v148 = vadd.f32 0.0, %v147
    %v149 = vpop.f32.mrb[0].mxu0
    %150 = vdwg.mxu0
    %vm151 = vcmask 130048
    %v153 = vsel %vm151, %v56, 0
    %v156 = vsel %vm151, %v57, 0
    %158 = vmatprep.subr.mxu0 0.0
    %159 = vmatpush1.msra.mxu0 %v143
    %160 = vmatprep.subr.mxu0 0.0
    %161 = vmatpush1.msra.mxu0 %v148
    %162 = vmatprep.subr.mxu0 0.0
    %163 = vmatpush1.msra.mxu0 0.0
    %164 = vmatprep.subr.mxu0 0.0
    %165 = vmatpush1.msra.mxu0 0.0
    %166 = vmatprep.subr.mxu0 0.0
    %167 = vmatpush1.msra.mxu0 0.0
    %168 = vmatprep.subr.mxu0 0.0
    %169 = vmatpush1.msra.mxu0 0.0
    %170 = vmatprep.subr.mxu0 0.0
    %171 = vmatpush1.msra.mxu0 0.0
    %172 = vmatprep.subr.mxu0 0.0
    %173 = vmatpush1.msra.mxu0 0.0
    %174 = vmatprep.subr.mxu0 0.0
    %175 = vmatpush1.msra.mxu0 0.0
    %176 = vmatprep.subr.mxu0 0.0
    %177 = vmatpush1.msra.mxu0 0.0
    %178 = vmatprep.subr.mxu0 0.0
    %179 = vmatpush1.msra.mxu0 0.0
    %180 = vmatprep.subr.mxu0 0.0
    %181 = vmatpush1.msra.mxu0 0.0
    %182 = vmatprep.subr.mxu0 0.0
    %183 = vmatpush1.msra.mxu0 0.0
    %184 = vmatprep.subr.mxu0 0.0
    %185 = vmatpush1.msra.mxu0 0.0
    %186 = vmatprep.subr.mxu0 0.0
    %187 = vmatpush1.msra.mxu0 0.0
    %188 = vmatprep.subr.mxu0 0.0
    %189 = vmatpush1.msra.mxu0 0.0
    %190 = vmatprep.subr.mxu0 0.0
    %191 = vmatpush1.msra.mxu0 0.0
    %192 = vmatprep.subr.mxu0 0.0
    %193 = vmatpush1.msra.mxu0 0.0
    %194 = vmatprep.subr.mxu0 0.0
    %195 = vmatpush1.msra.mxu0 0.0
    %196 = vmatprep.subr.mxu0 0.0
    %197 = vmatpush1.msra.mxu0 0.0
    %198 = vmatprep.subr.mxu0 0.0
    %199 = vmatpush1.msra.mxu0 0.0
    %200 = vmatprep.subr.mxu0 0.0
    %201 = vmatpush1.msra.mxu0 0.0
    %202 = vmatprep.subr.mxu0 0.0
    %203 = vmatpush1.msra.mxu0 0.0
    %204 = vmatprep.subr.mxu0 0.0
    %205 = vmatpush1.msra.mxu0 0.0
    %206 = vmatprep.subr.mxu0 0.0
    %207 = vmatpush1.msra.mxu0 0.0
    %208 = vmatprep.subr.mxu0 0.0
    %209 = vmatpush1.msra.mxu0 0.0
    %210 = vmatprep.subr.mxu0 0.0
    %211 = vmatpush1.msra.mxu0 0.0
    %212 = vmatprep.subr.mxu0 0.0
    %213 = vmatpush1.msra.mxu0 0.0
    %214 = vmatprep.subr.mxu0 0.0
    %215 = vmatpush1.msra.mxu0 0.0
    %216 = vmatprep.subr.mxu0 0.0
    %217 = vmatpush1.msra.mxu0 0.0
    %218 = vmatprep.subr.mxu0 0.0
    %219 = vmatpush1.msra.mxu0 0.0
    %220 = vmatprep.subr.mxu0 0.0
    %221 = vmatpush1.msra.mxu0 0.0
    %222 = vmatprep.mubr.f32.mxu0 0.0
    %223 = vmatmul.mubr.f32.gmra.mrb[0].mxu0 %v153
    %v224 = vpop.f32.mrb[0].mxu0
    %v225 = vadd.f32 0.0, %v224
    %v226 = vpop.f32.mrb[0].mxu0
    %227 = vmatprep.mubr.f32.mxu0 0.0
    %228 = vmatmul.mubr.f32.gmra.mrb[0].mxu0 %v156
    %v229 = vpop.f32.mrb[0].mxu0
    %v230 = vadd.f32 0.0, %v229
    %v231 = vpop.f32.mrb[0].mxu0
    %232 = vdwg.mxu0
    %233 = vst [vmem:[#allocation8] sm:$0xff] %v225
    %234 = vst [vmem:[#allocation8 + $0x8] sm:$0xff] %v230
    // Predicated region
    $region26: #{tpu_custom_call.1} parent=1 // pred_check
      _
    $region27: #{tpu_custom_call.1} parent=1 // pred_check_branch
      %236 = sbr.rel (0) target = $region29
    $region28: #{tpu_custom_call.1} parent=1 // pred_region
      %s238 = ssub.s32 256, 256
      %239 = vsyncadd [#allocation4], %s238
      %s240 = sshll.u32 [#allocation8], 4
      %s241 = int_to_ptr.vmem [resolvable:$true] %s240
      %246 = dma.vmem_to_hbm [thread:$0]  %s241, 256, %s3, [#allocation4], 128, 128, 8
    $region29: #{tpu_custom_call.1} parent=1 // pred_fallthru
      _
    // Predicated region
    $region30: #{tpu_custom_call.1} parent=1 // pred_check
      _
    $region31: #{tpu_custom_call.1} parent=1 // pred_check_branch
      %248 = sbr.rel (0) target = $region33
    $region32: #{tpu_custom_call.1} parent=1 // pred_region
      %249 = dma.done [#allocation4], 256
    $region33: #{tpu_custom_call.1} parent=1 // pred_fallthru
      _
    %250 = vsyncpa [#allocation3], 1
    %251 = vsyncpa [#allocation6], 1
    %252 = vsyncpa [#allocation4], 1

</llo_original>
